<compile_context>
chip_gen: v7x
topology: tpu7x:2x2x1
jax: 0.10.0
libtpu: 0.0.40
codegen_flags: <defaults>
</compile_context>

<pallas_src>
import functools
import math

import numpy as np
import jax
import jax.numpy as jnp
from jax.experimental import pallas as pl
from jax.experimental.pallas import tpu as pltpu


def _attention_conv_kernel(x_ref, w_ref, rel_ref, out_ref, *, ks, pad, Wr,
                           compute_dtype):
    """One (batch, row-band) grid step.

    x_ref   : (Cin, Ne)    halo'd row band; flat padded pixels on the lane axis
                           (Ne = (tH + 2*pad) * Wr + ks - 1, zero slack at the end).
    w_ref   : (3*C, Cin)   fused [q; k; v] 1x1-conv weights.
    rel_ref : (C, ks*ks)   hoisted relative-position table (rel_h | rel_w).
    out_ref : (C, NV)      NV = tH * Wr flat output pixels (lane dense).
    """
    C = rel_ref.shape[0]
    NV = out_ref.shape[1]

    xb = x_ref[...].astype(compute_dtype)
    w = w_ref[...].astype(compute_dtype)
    # Single fused MXU pass producing q, k and v.  Channels land on sublanes and
    # the flat padded spatial index on lanes, so every later op is lane dense.
    qkv = jnp.dot(w, xb, preferred_element_type=jnp.float32)       # (3C, Ne) f32

    dq = pad * Wr + pad
    q = qkv[0:C, dq:dq + NV]                  # query at every output pixel
    k_full = qkv[C:2 * C, :]                  # 8-aligned sublane slices (cheap)
    v_full = qkv[2 * C:3 * C, :]

    rel = rel_ref[...].astype(jnp.float32)    # (C, ks*ks)

    # ---- pass 1: scores for every neighbourhood offset + running max ----
    # A shift by (dh, dw) on the flat padded grid is a constant lane offset
    # d = dh*Wr + dw, i.e. a cheap lane-only slice of a dense 2-D tile.
    s_list = []
    m = None
    for dh in range(ks):
        for dw in range(ks):
            d = dh * Wr + dw
            kk = dh * ks + dw
            k_sh = k_full[:, d:d + NV]
            s = q * (k_sh + rel[:, kk:kk + 1])        # (C,1) broadcast over lanes
            s_list.append(s)
            m = s if m is None else jnp.maximum(m, s)

    # ---- pass 2: one exp per offset, accumulate numerator / denominator ----
    l = None
    acc = None
    kk = 0
    for dh in range(ks):
        for dw in range(ks):
            d = dh * Wr + dw
            v_sh = v_full[:, d:d + NV]
            p = jnp.exp(s_list[kk] - m)
            l = p if l is None else l + p
            acc = p * v_sh if acc is None else acc + p * v_sh
            kk += 1

    # EUP reciprocal seed + one Newton step: ~f32 accuracy, no VPU divide chain.
    inv = pl.reciprocal(l, approx=True)
    inv = inv * (2.0 - l * inv)
    out_ref[...] = (acc * inv).astype(out_ref.dtype)


def _row_tile_and_stride(H, Wp, C, pad, ks):
    """Pick a row tile tH (dividing H) whose working set fits comfortably in
    scoped VMEM, and a row stride Wr >= Wp so that tH*Wr % 128 == 0
    (lane-dense, unmasked output stores and 128-aligned output blocks)."""
    budget = 12 * 1024 * 1024          # stay under every chip's default scoped VMEM

    def wr_for(t):
        g = 128 // math.gcd(t, 128)
        return ((Wp + g - 1) // g) * g

    def est(t):
        # ~18 live (C, (t+2*pad)*Wr) f32 tiles: qkv, q, 9x s, m, p, l, acc, ...
        return 18 * C * (t + 2 * pad) * wr_for(t) * 4

    cands = [H] + [t for t in (128, 64, 32, 16, 8) if t < H and H % t == 0]
    for t in cands:
        if est(t) <= budget:
            return t, wr_for(t)
    t = cands[-1]
    return t, wr_for(t)


def attention_conv(x, wq, wk, wv, rel_h, rel_w, *, kernel_size, padding,
                   stride=1, groups=1, compute_dtype=jnp.float32):
    """x: (B, Cin, H, W) NCHW float32.  wq/wk/wv: (Cin, Cout).
    rel_h/rel_w: (kernel_size, Cout//2).  Returns (B, Cout, H, W).
    compute_dtype=jnp.bfloat16 is recommended for the matmul inputs on v6e/v7x."""
    assert stride == 1, "stride=1 only (the torch .view requires H_out == H)"
    B, Cin, H, W = x.shape
    C = wq.shape[1]
    ks, pad = kernel_size, padding
    assert C % 2 == 0, "out_channels must be even (rel_h/rel_w split)"
    assert C % groups == 0  # groups only reshapes; it does not change the math
    Hp, Wp = H + 2 * pad, W + 2 * pad
    assert Hp - ks + 1 == H and Wp - ks + 1 == W, "need 2*padding == kernel_size - 1"

    # --- tiling / layout parameters ---
    tH, Wr = _row_tile_and_stride(H, Wp, C, pad, ks)
    nR = H // tH
    NV = tH * Wr                      # output pixels per band (multiple of 128)
    tHp = tH + 2 * pad                # halo'd band height
    Ne = tHp * Wr + (ks - 1)          # band length incl. slack for shifted slices

    # --- pack inputs (NCHW stays NCHW; pad is a single fused XLA copy) ---
    xpad = jnp.pad(x, ((0, 0), (0, 0), (pad, pad), (pad, pad + (Wr - Wp))))
    xflat = jnp.pad(xpad.reshape(B, Cin, Hp * Wr), ((0, 0), (0, 0), (0, ks - 1)))
    if nR == 1:
        xbands = xflat[:, None, :, :]                              # (B, 1, Cin, Ne)
    else:
        xbands = jnp.stack([xflat[:, :, r * NV:r * NV + Ne] for r in range(nR)],
                           axis=1)                                 # (B, nR, Cin, Ne)

    wqkv_t = jnp.concatenate([wq, wk, wv], axis=1).T               # (3C, Cin)
    rel_t = jnp.concatenate([jnp.repeat(rel_h, ks, axis=0),        # row kk -> rel_h[dh]
                             jnp.tile(rel_w, (ks, 1))], axis=1).T  # (C, ks*ks)

    kernel = functools.partial(_attention_conv_kernel, ks=ks, pad=pad, Wr=Wr,
                               compute_dtype=compute_dtype)

    cost = pl.CostEstimate(
        flops=int(2 * B * nR * 3 * C * Cin * Ne + 6 * B * nR * C * NV * ks * ks),
        transcendentals=int(B * nR * C * NV * (ks * ks + 1)),
        bytes_accessed=int(4 * (xbands.size + wqkv_t.size + rel_t.size
                                + B * C * H * Wr)),
    )

    out_flat = pl.pallas_call(
        kernel,
        out_shape=jax.ShapeDtypeStruct((B, C, H * Wr), jnp.float32),
        grid_spec=pltpu.PrefetchScalarGridSpec(
            num_scalar_prefetch=0,
            grid=(B, nR),
            in_specs=[
                pl.BlockSpec((None, None, Cin, Ne), lambda b, r: (b, r, 0, 0)),
                pl.BlockSpec((3 * C, Cin), lambda b, r: (0, 0)),
                pl.BlockSpec((C, ks * ks), lambda b, r: (0, 0)),
            ],
            out_specs=pl.BlockSpec((None, C, NV), lambda b, r: (b, 0, r)),
        ),
        compiler_params=pltpu.CompilerParams(
            dimension_semantics=("parallel", "arbitrary")),
        cost_estimate=cost,
    )(xbands.astype(compute_dtype), wqkv_t.astype(compute_dtype), rel_t)

    # strip the right-extension garbage columns; already NCHW
    return out_flat.reshape(B, C, H, Wr)[:, :, :, :W]


def _reference(x, wq, wk, wv, rel_h, rel_w, ks, pad):
    """Pure-JAX reference mirroring the PyTorch forward."""
    B, Cin, H, W = x.shape
    xp = jnp.pad(x, ((0, 0), (0, 0), (pad, pad), (pad, pad)))
    conv1x1 = lambda inp, w: jnp.einsum('bchw,co->bohw', inp, w)
    q = conv1x1(x, wq)
    k = conv1x1(xp, wk)
    v = conv1x1(xp, wv)
    k_unf = jnp.stack([k[:, :, dh:dh + H, dw:dw + W]
                       for dh in range(ks) for dw in range(ks)], axis=-1)
    v_unf = jnp.stack([v[:, :, dh:dh + H, dw:dw + W]
                       for dh in range(ks) for dw in range(ks)], axis=-1)
    rel = jnp.stack([jnp.concatenate([rel_h[dh], rel_w[dw]])
                     for dh in range(ks) for dw in range(ks)], axis=-1)  # (Cout, kk)
    k_unf = k_unf + rel[None, :, None, None, :]
    s = q[..., None] * k_unf
    p = jax.nn.softmax(s, axis=-1)
    return jnp.sum(p * v_unf, axis=-1)


if __name__ == "__main__":
    # Small, module-consistent shapes.
    B, Cin, Cout, H, W = 2, 4, 8, 16, 16
    kernel_size, padding, stride, groups = 3, 1, 1, 2

    key = jax.random.PRNGKey(0)
    kx, kq, kk_, kv, krh, krw = jax.random.split(key, 6)

    x = jax.random.normal(kx, (B, Cin, H, W), dtype=jnp.float32)

    # Kaiming-normal (fan_out, relu) for 1x1 convs: std = sqrt(2 / Cout).
    std = float(np.sqrt(2.0 / Cout))
    wq = jax.random.normal(kq, (Cin, Cout), dtype=jnp.float32) * std
    wk = jax.random.normal(kk_, (Cin, Cout), dtype=jnp.float32) * std
    wv = jax.random.normal(kv, (Cin, Cout), dtype=jnp.float32) * std
    # rel_h / rel_w ~ N(0, 1); stored as (kernel_size, Cout//2) = rel[k_pos, channel].
    rel_h = jax.random.normal(krh, (kernel_size, Cout // 2), dtype=jnp.float32)
    rel_w = jax.random.normal(krw, (kernel_size, Cout // 2), dtype=jnp.float32)

    out = attention_conv(x, wq, wk, wv, rel_h, rel_w,
                         kernel_size=kernel_size, padding=padding,
                         stride=stride, groups=groups)
    out = jax.block_until_ready(out)

    ref = _reference(x, wq, wk, wv, rel_h, rel_w, kernel_size, padding)
    assert out.shape == (B, Cout, H, W)
    np.testing.assert_allclose(np.asarray(out), np.asarray(ref), rtol=1e-4, atol=1e-4)

    print("KERNEL_OK")
</pallas_src>

<mosaic_0001>
module attributes {stable_mosaic.version = 11 : i64} {
  func.func @_attention_conv_kernel(%arg0: i32, %arg1: i32, %arg2: memref<1x1x4x434xf32, #tpu.memory_space<vmem>>, %arg3: memref<24x4xf32, #tpu.memory_space<vmem>>, %arg4: memref<8x9xf32, #tpu.memory_space<vmem>>, %arg5: memref<1x8x384xf32, #tpu.memory_space<vmem>>) attributes {dimension_semantics = [#tpu.dimension_semantics<parallel>, #tpu.dimension_semantics<arbitrary>], iteration_bounds = array<i64: 2, 1>, scalar_prefetch = 0 : i64, scratch_operands = 0 : i64, tpu.core_type = #tpu.core_type<tc>, window_params = [{transform_indices = @transform_0, window_bounds = array<i64: 1, 1, 4, 434>}, {pipeline_mode = #tpu.pipeline_mode<synchronous>, transform_indices = @transform_1, window_bounds = array<i64: 24, 4>}, {pipeline_mode = #tpu.pipeline_mode<synchronous>, transform_indices = @transform_2, window_bounds = array<i64: 8, 9>}, {transform_indices = @transform_3, window_bounds = array<i64: 1, 8, 384>}]} {
    %c0 = arith.constant 0 : index
    %c0_0 = arith.constant 0 : index
    %c0_1 = arith.constant 0 : index
    %c0_2 = arith.constant 0 : index
    %0 = vector.load %arg2[%c0, %c0_0, %c0_1, %c0_2] : memref<1x1x4x434xf32, #tpu.memory_space<vmem>>, vector<1x1x4x434xf32>
    %1 = vector.shape_cast %0 : vector<1x1x4x434xf32> to vector<4x434xf32>
    %c0_3 = arith.constant 0 : index
    %c0_4 = arith.constant 0 : index
    %2 = vector.load %arg3[%c0_3, %c0_4] : memref<24x4xf32, #tpu.memory_space<vmem>>, vector<24x4xf32>
    %cst = arith.constant dense<0.000000e+00> : vector<24x434xf32>
    %3 = tpu.matmul %2, %1, %cst {dimension_numbers = #tpu.dot_dimension_numbers<[1], [0], [0], [1], [0, 0, 1, 1], [], []>} : vector<24x4xf32>, vector<4x434xf32>, vector<24x434xf32> -> vector<24x434xf32>
    %4 = vector.extract_strided_slice %3 {offsets = [0, 25], sizes = [8, 384], strides = [1, 1]} : vector<24x434xf32> to vector<8x384xf32>
    %5 = vector.extract_strided_slice %3 {offsets = [8, 0], sizes = [8, 434], strides = [1, 1]} : vector<24x434xf32> to vector<8x434xf32>
    %6 = vector.extract_strided_slice %3 {offsets = [16, 0], sizes = [8, 434], strides = [1, 1]} : vector<24x434xf32> to vector<8x434xf32>
    %c0_5 = arith.constant 0 : index
    %c0_6 = arith.constant 0 : index
    %7 = vector.load %arg4[%c0_5, %c0_6] : memref<8x9xf32, #tpu.memory_space<vmem>>, vector<8x9xf32>
    %8 = vector.extract_strided_slice %5 {offsets = [0, 0], sizes = [8, 384], strides = [1, 1]} : vector<8x434xf32> to vector<8x384xf32>
    %9 = vector.extract_strided_slice %7 {offsets = [0, 0], sizes = [8, 1], strides = [1, 1]} : vector<8x9xf32> to vector<8x1xf32>
    %10 = vector.broadcast %9 : vector<8x1xf32> to vector<8x384xf32>
    %11 = arith.addf %8, %10 : vector<8x384xf32>
    %12 = arith.mulf %4, %11 : vector<8x384xf32>
    %13 = vector.extract_strided_slice %5 {offsets = [0, 1], sizes = [8, 384], strides = [1, 1]} : vector<8x434xf32> to vector<8x384xf32>
    %14 = vector.extract_strided_slice %7 {offsets = [0, 1], sizes = [8, 1], strides = [1, 1]} : vector<8x9xf32> to vector<8x1xf32>
    %15 = vector.broadcast %14 : vector<8x1xf32> to vector<8x384xf32>
    %16 = arith.addf %13, %15 : vector<8x384xf32>
    %17 = arith.mulf %4, %16 : vector<8x384xf32>
    %18 = arith.maximumf %12, %17 : vector<8x384xf32>
    %19 = vector.extract_strided_slice %5 {offsets = [0, 2], sizes = [8, 384], strides = [1, 1]} : vector<8x434xf32> to vector<8x384xf32>
    %20 = vector.extract_strided_slice %7 {offsets = [0, 2], sizes = [8, 1], strides = [1, 1]} : vector<8x9xf32> to vector<8x1xf32>
    %21 = vector.broadcast %20 : vector<8x1xf32> to vector<8x384xf32>
    %22 = arith.addf %19, %21 : vector<8x384xf32>
    %23 = arith.mulf %4, %22 : vector<8x384xf32>
    %24 = arith.maximumf %18, %23 : vector<8x384xf32>
    %25 = vector.extract_strided_slice %5 {offsets = [0, 24], sizes = [8, 384], strides = [1, 1]} : vector<8x434xf32> to vector<8x384xf32>
    %26 = vector.extract_strided_slice %7 {offsets = [0, 3], sizes = [8, 1], strides = [1, 1]} : vector<8x9xf32> to vector<8x1xf32>
    %27 = vector.broadcast %26 : vector<8x1xf32> to vector<8x384xf32>
    %28 = arith.addf %25, %27 : vector<8x384xf32>
    %29 = arith.mulf %4, %28 : vector<8x384xf32>
    %30 = arith.maximumf %24, %29 : vector<8x384xf32>
    %31 = vector.extract_strided_slice %5 {offsets = [0, 25], sizes = [8, 384], strides = [1, 1]} : vector<8x434xf32> to vector<8x384xf32>
    %32 = vector.extract_strided_slice %7 {offsets = [0, 4], sizes = [8, 1], strides = [1, 1]} : vector<8x9xf32> to vector<8x1xf32>
    %33 = vector.broadcast %32 : vector<8x1xf32> to vector<8x384xf32>
    %34 = arith.addf %31, %33 : vector<8x384xf32>
    %35 = arith.mulf %4, %34 : vector<8x384xf32>
    %36 = arith.maximumf %30, %35 : vector<8x384xf32>
    %37 = vector.extract_strided_slice %5 {offsets = [0, 26], sizes = [8, 384], strides = [1, 1]} : vector<8x434xf32> to vector<8x384xf32>
    %38 = vector.extract_strided_slice %7 {offsets = [0, 5], sizes = [8, 1], strides = [1, 1]} : vector<8x9xf32> to vector<8x1xf32>
    %39 = vector.broadcast %38 : vector<8x1xf32> to vector<8x384xf32>
    %40 = arith.addf %37, %39 : vector<8x384xf32>
    %41 = arith.mulf %4, %40 : vector<8x384xf32>
    %42 = arith.maximumf %36, %41 : vector<8x384xf32>
    %43 = vector.extract_strided_slice %5 {offsets = [0, 48], sizes = [8, 384], strides = [1, 1]} : vector<8x434xf32> to vector<8x384xf32>
    %44 = vector.extract_strided_slice %7 {offsets = [0, 6], sizes = [8, 1], strides = [1, 1]} : vector<8x9xf32> to vector<8x1xf32>
    %45 = vector.broadcast %44 : vector<8x1xf32> to vector<8x384xf32>
    %46 = arith.addf %43, %45 : vector<8x384xf32>
    %47 = arith.mulf %4, %46 : vector<8x384xf32>
    %48 = arith.maximumf %42, %47 : vector<8x384xf32>
    %49 = vector.extract_strided_slice %5 {offsets = [0, 49], sizes = [8, 384], strides = [1, 1]} : vector<8x434xf32> to vector<8x384xf32>
    %50 = vector.extract_strided_slice %7 {offsets = [0, 7], sizes = [8, 1], strides = [1, 1]} : vector<8x9xf32> to vector<8x1xf32>
    %51 = vector.broadcast %50 : vector<8x1xf32> to vector<8x384xf32>
    %52 = arith.addf %49, %51 : vector<8x384xf32>
    %53 = arith.mulf %4, %52 : vector<8x384xf32>
    %54 = arith.maximumf %48, %53 : vector<8x384xf32>
    %55 = vector.extract_strided_slice %5 {offsets = [0, 50], sizes = [8, 384], strides = [1, 1]} : vector<8x434xf32> to vector<8x384xf32>
    %56 = vector.extract_strided_slice %7 {offsets = [0, 8], sizes = [8, 1], strides = [1, 1]} : vector<8x9xf32> to vector<8x1xf32>
    %57 = vector.broadcast %56 : vector<8x1xf32> to vector<8x384xf32>
    %58 = arith.addf %55, %57 : vector<8x384xf32>
    %59 = arith.mulf %4, %58 : vector<8x384xf32>
    %60 = arith.maximumf %54, %59 : vector<8x384xf32>
    %61 = vector.extract_strided_slice %6 {offsets = [0, 0], sizes = [8, 384], strides = [1, 1]} : vector<8x434xf32> to vector<8x384xf32>
    %62 = arith.subf %12, %60 : vector<8x384xf32>
    %63 = math.exp %62 : vector<8x384xf32>
    %64 = arith.mulf %63, %61 : vector<8x384xf32>
    %65 = vector.extract_strided_slice %6 {offsets = [0, 1], sizes = [8, 384], strides = [1, 1]} : vector<8x434xf32> to vector<8x384xf32>
    %66 = arith.subf %17, %60 : vector<8x384xf32>
    %67 = math.exp %66 : vector<8x384xf32>
    %68 = arith.addf %63, %67 : vector<8x384xf32>
    %69 = arith.mulf %67, %65 : vector<8x384xf32>
    %70 = arith.addf %64, %69 : vector<8x384xf32>
    %71 = vector.extract_strided_slice %6 {offsets = [0, 2], sizes = [8, 384], strides = [1, 1]} : vector<8x434xf32> to vector<8x384xf32>
    %72 = arith.subf %23, %60 : vector<8x384xf32>
    %73 = math.exp %72 : vector<8x384xf32>
    %74 = arith.addf %68, %73 : vector<8x384xf32>
    %75 = arith.mulf %73, %71 : vector<8x384xf32>
    %76 = arith.addf %70, %75 : vector<8x384xf32>
    %77 = vector.extract_strided_slice %6 {offsets = [0, 24], sizes = [8, 384], strides = [1, 1]} : vector<8x434xf32> to vector<8x384xf32>
    %78 = arith.subf %29, %60 : vector<8x384xf32>
    %79 = math.exp %78 : vector<8x384xf32>
    %80 = arith.addf %74, %79 : vector<8x384xf32>
    %81 = arith.mulf %79, %77 : vector<8x384xf32>
    %82 = arith.addf %76, %81 : vector<8x384xf32>
    %83 = vector.extract_strided_slice %6 {offsets = [0, 25], sizes = [8, 384], strides = [1, 1]} : vector<8x434xf32> to vector<8x384xf32>
    %84 = arith.subf %35, %60 : vector<8x384xf32>
    %85 = math.exp %84 : vector<8x384xf32>
    %86 = arith.addf %80, %85 : vector<8x384xf32>
    %87 = arith.mulf %85, %83 : vector<8x384xf32>
    %88 = arith.addf %82, %87 : vector<8x384xf32>
    %89 = vector.extract_strided_slice %6 {offsets = [0, 26], sizes = [8, 384], strides = [1, 1]} : vector<8x434xf32> to vector<8x384xf32>
    %90 = arith.subf %41, %60 : vector<8x384xf32>
    %91 = math.exp %90 : vector<8x384xf32>
    %92 = arith.addf %86, %91 : vector<8x384xf32>
    %93 = arith.mulf %91, %89 : vector<8x384xf32>
    %94 = arith.addf %88, %93 : vector<8x384xf32>
    %95 = vector.extract_strided_slice %6 {offsets = [0, 48], sizes = [8, 384], strides = [1, 1]} : vector<8x434xf32> to vector<8x384xf32>
    %96 = arith.subf %47, %60 : vector<8x384xf32>
    %97 = math.exp %96 : vector<8x384xf32>
    %98 = arith.addf %92, %97 : vector<8x384xf32>
    %99 = arith.mulf %97, %95 : vector<8x384xf32>
    %100 = arith.addf %94, %99 : vector<8x384xf32>
    %101 = vector.extract_strided_slice %6 {offsets = [0, 49], sizes = [8, 384], strides = [1, 1]} : vector<8x434xf32> to vector<8x384xf32>
    %102 = arith.subf %53, %60 : vector<8x384xf32>
    %103 = math.exp %102 : vector<8x384xf32>
    %104 = arith.addf %98, %103 : vector<8x384xf32>
    %105 = arith.mulf %103, %101 : vector<8x384xf32>
    %106 = arith.addf %100, %105 : vector<8x384xf32>
    %107 = vector.extract_strided_slice %6 {offsets = [0, 50], sizes = [8, 384], strides = [1, 1]} : vector<8x434xf32> to vector<8x384xf32>
    %108 = arith.subf %59, %60 : vector<8x384xf32>
    %109 = math.exp %108 : vector<8x384xf32>
    %110 = arith.addf %104, %109 : vector<8x384xf32>
    %111 = arith.mulf %109, %107 : vector<8x384xf32>
    %112 = arith.addf %106, %111 : vector<8x384xf32>
    %113 = tpu.reciprocal %110 {approx = true} : vector<8x384xf32> -> vector<8x384xf32>
    %114 = arith.mulf %110, %113 : vector<8x384xf32>
    %cst_7 = arith.constant 2.000000e+00 : f32
    %115 = vector.broadcast %cst_7 : f32 to vector<8x384xf32>
    %116 = arith.subf %115, %114 : vector<8x384xf32>
    %117 = arith.mulf %113, %116 : vector<8x384xf32>
    %118 = arith.mulf %112, %117 : vector<8x384xf32>
    %c0_8 = arith.constant 0 : index
    %c0_9 = arith.constant 0 : index
    %c0_10 = arith.constant 0 : index
    %119 = vector.load %arg5[%c0_8, %c0_9, %c0_10] : memref<1x8x384xf32, #tpu.memory_space<vmem>>, vector<1x8x384xf32>
    %120 = vector.shape_cast %119 : vector<1x8x384xf32> to vector<8x384xf32>
    %121 = vector.shape_cast %118 : vector<8x384xf32> to vector<1x8x384xf32>
    tpu.vector_store %arg5[%c0_8, %c0_9, %c0_10], %121 {strides = array<i32>} : memref<1x8x384xf32, #tpu.memory_space<vmem>>, vector<1x8x384xf32>,
    return
  }
  func.func @transform_0(%arg0: i32, %arg1: i32) -> (i32, i32, i32, i32) {
    %c0_i32 = arith.constant 0 : i32
    %c0_i32_0 = arith.constant 0 : i32
    %c0_i32_1 = arith.constant 0 : i32
    return %arg0, %arg1, %c0_i32, %c0_i32_0 : i32, i32, i32, i32
  }
  func.func @transform_1(%arg0: i32, %arg1: i32) -> (i32, i32) {
    %c0_i32 = arith.constant 0 : i32
    %c0_i32_0 = arith.constant 0 : i32
    %c0_i32_1 = arith.constant 0 : i32
    return %c0_i32, %c0_i32_0 : i32, i32
  }
  func.func @transform_2(%arg0: i32, %arg1: i32) -> (i32, i32) {
    %c0_i32 = arith.constant 0 : i32
    %c0_i32_0 = arith.constant 0 : i32
    %c0_i32_1 = arith.constant 0 : i32
    return %c0_i32, %c0_i32_0 : i32, i32
  }
  func.func @transform_3(%arg0: i32, %arg1: i32) -> (i32, i32, i32) {
    %c0_i32 = arith.constant 0 : i32
    %c0_i32_0 = arith.constant 0 : i32
    return %arg0, %c0_i32, %arg1 : i32, i32, i32
  }
}

</mosaic_0001>

<llo_original>
// kernel: tpu_custom_call.1
$region0: #{tpu_custom_call.1}
  #allocation0 [shape = 'u32[]', space=smem, size = 0x4, offset = 0x4, fixed_abs, tag = 'smem constant byte address 0x4 - core index']
  #allocation1 [shape = 'u32[144,128]{1,0:T(1,128)}', space=vmem, size = 0x12000, scoped, tag = 'internal scratch']
  %s0 = inlined_call_operand.hbm [shape: f32[2,1,4,434], index: 0, kind: input, shape index: {}]
  %s1 = inlined_call_operand.vmem [shape: f32[24,4], index: 1, kind: input, shape index: {}]
  %s2 = inlined_call_operand.vmem [shape: f32[8,9], index: 2, kind: input, shape index: {}]
  %s3 = inlined_call_operand.hbm [shape: f32[2,8,384], index: 3, kind: output, shape index: {}]
  %s4 = sld [smem:[#allocation0]]
  $region49: #{tpu_custom_call.1} parent=0
    _
  %s6 = ssub.s32 1, %s4
  %s7 = scalar_select 0, %s6, %s4
  $region1: #{tpu_custom_call.1} parent=0
    #allocation2 [shape = 'u8[16384]{0}', space=vmem, size = 0x4000, scoped, tag = 'input window, operand 0']
    #allocation3 [shape = 's32[2]{0}', space=sflag, size = 0x8, scoped, tag = 'scoped memory for tpu_custom_call.1']
    #allocation4 [shape = 's32[2]{0}', space=sflag, size = 0x8, scoped, tag = 'scoped memory for tpu_custom_call.1']
    #allocation5 [shape = 'u8[24576]{0}', space=vmem, size = 0x6000, scoped, tag = 'output window, operand 0']
    %8 = vsyncpa [#allocation3], 0
    %s9 = scalar_lea.sflag [#allocation3], 1
    %10 = vsyncpa %s9, 0
    %11 = vsyncpa [#allocation4], 0
    %s12 = scalar_lea.sflag [#allocation4], 1
    %13 = vsyncpa %s12, 0
    loop: start=0, step=1, limit=4
    $region2: #{tpu_custom_call.1} parent=1 // loop_pre_header
      _
    $region3: #{tpu_custom_call.1} parent=1 // loop_header
      %s15 = sphi 0, %s19
      %p16 = scmp.ge.s32.totalorder %s15, 4
      %s22 = sphi 0, %s34
      %s23 = sphi 0, %s30
      %s24 = sphi 0, %s22
      %s25 = sphi 0, %s23
      %s26 = sphi 0, %s24
      %s27 = sphi 0, %s25
      %s39 = sphi 0, %s41
      %s42 = sphi 0, %s39
      %s43 = sphi 0, %s42
      %s59 = sphi 0, %s43
      %s63 = sphi 0, %s63
      %s65 = sphi 0, %s63
      %s66 = sphi 0, %s65
      %s80 = sphi 0, %s66
      %s84 = sphi 0, %s84
      %s86 = sphi 0, %s84
      %s87 = sphi 0, %s86
      %s101 = sphi 0, %s87
      %s109 = sphi 0, %s111
      %s112 = sphi 0, %s109
      %s113 = sphi 0, %s112
      %s129 = sphi 0, %s113
    $region4: #{tpu_custom_call.1} parent=1 // loop_header_branch
      %18 = sbr.rel (%p16) target = $region8
    $region5: #{tpu_custom_call.1} parent=1 // loop_body
      %s20 = ssub.s32 %s15, 1
      %s21 = ssub.s32 %s15, 2
      %s28 = sadd.s32 1, %s23
      %p29 = scmp.ge.s32.totalorder %s28, 1
      %s30 = scalar_select %p29, 0, %s28
      %s31 = sadd.s32 1, %s22
      %s32 = scalar_select %p29, %s31, %s22
      %p33 = scmp.ge.s32.totalorder %s32, 2
      %s34 = scalar_select %p33, 0, %s32
      %s35 = ssub.s32 %s22, %s34
      %s36 = ssub.s32 %s23, %s30
      %s37 = sor.u32 %s35, %s36
      %p38 = scmp.eq.s32.totalorder %s37, 0
      %s40 = sadd.s32 %s39, 1
      %s41 = scalar_select %p38, %s39, %s40
      %p44 = pneg %p38
      %p45 = scmp.eq.s32.totalorder %s15, 1
      %p46 = por %p44, %p45
      %p47 = scmp.ne.s32.totalorder %s39, %s42
      %p48 = scmp.eq.s32.totalorder %s15, 0
      %p49 = por %p47, %p48
      %p50 = scmp.ne.s32.totalorder %s39, %s42
      %p51 = scmp.eq.s32.totalorder %s20, 1
      %p52 = por %p50, %p51
      %p53 = scmp.ne.s32.totalorder %s42, %s43
      %p54 = scmp.eq.s32.totalorder %s20, 0
      %p55 = por %p53, %p54
      %p56 = scmp.ne.s32.totalorder %s42, %s43
      %p57 = scmp.eq.s32.totalorder %s21, 1
      %p58 = por %p56, %p57
      %p60 = scmp.ne.s32.totalorder %s43, %s59
      %p61 = scmp.eq.s32.totalorder %s21, 0
      %p62 = por %p60, %p61
      %s64 = sadd.s32 %s63, 1
      %p67 = scmp.eq.s32.totalorder %s15, 1
      %p68 = scmp.ne.s32.totalorder %s63, %s65
      %p69 = scmp.eq.s32.totalorder %s15, 0
      %p70 = por %p68, %p69
      %p71 = scmp.ne.s32.totalorder %s63, %s65
      %p72 = scmp.eq.s32.totalorder %s20, 1
      %p73 = por %p71, %p72
      %p74 = scmp.ne.s32.totalorder %s65, %s66
      %p75 = scmp.eq.s32.totalorder %s20, 0
      %p76 = por %p74, %p75
      %p77 = scmp.ne.s32.totalorder %s65, %s66
      %p78 = scmp.eq.s32.totalorder %s21, 1
      %p79 = por %p77, %p78
      %p81 = scmp.ne.s32.totalorder %s66, %s80
      %p82 = scmp.eq.s32.totalorder %s21, 0
      %p83 = por %p81, %p82
      %s85 = sadd.s32 %s84, 1
      %p88 = scmp.eq.s32.totalorder %s15, 1
      %p89 = scmp.ne.s32.totalorder %s84, %s86
      %p90 = scmp.eq.s32.totalorder %s15, 0
      %p91 = por %p89, %p90
      %p92 = scmp.ne.s32.totalorder %s84, %s86
      %p93 = scmp.eq.s32.totalorder %s20, 1
      %p94 = por %p92, %p93
      %p95 = scmp.ne.s32.totalorder %s86, %s87
      %p96 = scmp.eq.s32.totalorder %s20, 0
      %p97 = por %p95, %p96
      %p98 = scmp.ne.s32.totalorder %s86, %s87
      %p99 = scmp.eq.s32.totalorder %s21, 1
      %p100 = por %p98, %p99
      %p102 = scmp.ne.s32.totalorder %s87, %s101
      %p103 = scmp.eq.s32.totalorder %s21, 0
      %p104 = por %p102, %p103
      %s105 = ssub.s32 %s22, %s34
      %s106 = ssub.s32 %s23, %s30
      %s107 = sor.u32 %s105, %s106
      %p108 = scmp.eq.s32.totalorder %s107, 0
      %s110 = sadd.s32 %s109, 1
      %s111 = scalar_select %p108, %s109, %s110
      %p114 = pneg %p108
      %p115 = scmp.eq.s32.totalorder %s15, 1
      %p116 = por %p114, %p115
      %p117 = scmp.ne.s32.totalorder %s109, %s112
      %p118 = scmp.eq.s32.totalorder %s15, 0
      %p119 = por %p117, %p118
      %p120 = scmp.ne.s32.totalorder %s109, %s112
      %p121 = scmp.eq.s32.totalorder %s20, 1
      %p122 = por %p120, %p121
      %p123 = scmp.ne.s32.totalorder %s112, %s113
      %p124 = scmp.eq.s32.totalorder %s20, 0
      %p125 = por %p123, %p124
      %p126 = scmp.ne.s32.totalorder %s112, %s113
      %p127 = scmp.eq.s32.totalorder %s21, 1
      %p128 = por %p126, %p127
      %p130 = scmp.ne.s32.totalorder %s113, %s129
      %p131 = scmp.eq.s32.totalorder %s21, 0
      %p132 = por %p130, %p131
      %p133 = scmp.le.s32.totalorder 1, %s15
      %p134 = scmp.lt.s32.totalorder %s15, 3
      %p135 = pnand %p133, %p134
      %p136 = pneg %p135
      // Predicated region
      $region9: #{tpu_custom_call.1} parent=5 // pred_check
        _
      $region10: #{tpu_custom_call.1} parent=5 // pred_check_branch
        %138 = sbr.rel (%p135) target = $region12
      $region11: #{tpu_custom_call.1} parent=5 // pred_region
        %s139 = ssub.s32 %s15, 1
        // Predicated region
        $region13: #{tpu_custom_call.1} parent=11 // pred_check
          %p140 = pneg %p76
        $region14: #{tpu_custom_call.1} parent=11 // pred_check_branch
          %142 = sbr.rel (%p140) target = $region16
        $region15: #{tpu_custom_call.1} parent=11 // pred_region
          _
        $region16: #{tpu_custom_call.1} parent=11 // pred_fallthru
          _
        // Predicated region
        $region17: #{tpu_custom_call.1} parent=11 // pred_check
          %p143 = pneg %p97
        $region18: #{tpu_custom_call.1} parent=11 // pred_check_branch
          %145 = sbr.rel (%p143) target = $region20
        $region19: #{tpu_custom_call.1} parent=11 // pred_region
          _
        $region20: #{tpu_custom_call.1} parent=11 // pred_fallthru
          _
      $region12: #{tpu_custom_call.1} parent=5 // pred_fallthru
        _
      %p146 = scmp.lt.s32.totalorder %s15, 2
      // Predicated region
      $region21: #{tpu_custom_call.1} parent=5 // pred_check
        %p147 = pneg %p146
      $region22: #{tpu_custom_call.1} parent=5 // pred_check_branch
        %149 = sbr.rel (%p147) target = $region24
      $region23: #{tpu_custom_call.1} parent=5 // pred_region
        // Predicated region
        $region25: #{tpu_custom_call.1} parent=23 // pred_check
          %p150 = pneg %p49
        $region26: #{tpu_custom_call.1} parent=23 // pred_check_branch
          %152 = sbr.rel (%p150) target = $region28
        $region27: #{tpu_custom_call.1} parent=23 // pred_region
          %s153 = sand.u32 %s39, 1
          %s154 = scalar_lea.sflag [#allocation3], %s153
          %s155 = sand.u32 %s39, 1
          %s156 = smul.addr %s155, 16
          %s157 = scalar_lea.vmem [#allocation2], %s156
          %s159 = ssub.s32 256, 256
          %160 = vsyncadd %s154, %s159
          %s161 = smul.addr %s23, 4
          %s162 = smul.addr %s22, 4
          %s163 = sadd.s32 %s161, %s162
          %s164 = smul.addr %s163, 64
          %s165 = scalar_lea.hbm %s0, %s164
          %s167 = sshll.u32 %s157, 4
          %s168 = int_to_ptr.vmem [resolvable:$true] %s167
          %170 = dma.hbm_to_vmem [thread:$0]  %s165, 256, %s168, %s154
        $region28: #{tpu_custom_call.1} parent=23 // pred_fallthru
          _
      $region24: #{tpu_custom_call.1} parent=5 // pred_fallthru
        _
      %p171 = scmp.le.s32.totalorder 1, %s15
      %p172 = scmp.lt.s32.totalorder %s15, 3
      %p173 = pnand %p171, %p172
      %p174 = pneg %p173
      // Predicated region
      $region29: #{tpu_custom_call.1} parent=5 // pred_check
        _
      $region30: #{tpu_custom_call.1} parent=5 // pred_check_branch
        %176 = sbr.rel (%p173) target = $region32
      $region31: #{tpu_custom_call.1} parent=5 // pred_region
        %s177 = ssub.s32 %s15, 1
        %s178 = sand.u32 %s42, 1
        %s179 = scalar_lea.sflag [#allocation3], %s178
        %s180 = sand.u32 %s42, 1
        %s181 = smul.addr %s180, 16
        %s182 = scalar_lea.vmem [#allocation2], %s181
        // Predicated region
        $region33: #{tpu_custom_call.1} parent=31 // pred_check
          %p183 = pneg %p55
        $region34: #{tpu_custom_call.1} parent=31 // pred_check_branch
          %185 = sbr.rel (%p183) target = $region36
        $region35: #{tpu_custom_call.1} parent=31 // pred_region
          %186 = dma.done %s179, 256
        $region36: #{tpu_custom_call.1} parent=31 // pred_fallthru
          _
        %s187 = sand.u32 %s42, 1
        %s188 = scalar_lea.sflag [#allocation3], %s187
        %s189 = sand.u32 %s42, 1
        %s190 = smul.addr %s189, 16
        %s191 = scalar_lea.vmem [#allocation2], %s190
        %p192 = pneg %p55
        %p193 = pneg %p52
        %p194 = pneg %p76
        %p195 = pneg %p73
        %p196 = pneg %p97
        %p197 = pneg %p94
        %p198 = pneg %p125
        %p199 = pneg %p122
        %s200 = sand.u32 %s112, 1
        %s201 = scalar_lea.sflag [#allocation4], %s200
        %s202 = sand.u32 %s112, 1
        %s203 = smul.addr %s202, 24
        %s204 = scalar_lea.vmem [#allocation5], %s203
        %s205 = smul.u32 3, %s25
        %v206 = vld [vmem:[%s182] sm:$0xff]
        %v207 = vld [vmem:[%s182 + $0x8] sm:$0xff]
        %v208 = vld [vmem:[%s1] sm:$0xff]
        %v209 = vld [vmem:[%s1 + $0x8] sm:$0xff]
        %v210 = vld [vmem:[%s1 + $0x10] sm:$0xff]
        %v213 = vcombine.high %v206, %v206
        %v214 = vcombine.high %v207, %v207
        %vm215 = vcmask 31744
        %v217 = vsel %vm215, %v208, 0
        %v220 = vsel %vm215, %v209, 0
        %v223 = vsel %vm215, %v210, 0
        %vm225 = vcmask 1043456
        %v226 = vsel %vm225, %v206, 0
        %v228 = vsel %vm225, %v213, 0
        %v230 = vsel %vm225, %v207, 0
        %v232 = vsel %vm225, %v214, 0
        %234 = vmatprep.subr.mxu0 %v228
        %235 = vmatpush1.msra.mxu0 %v226
        %236 = vmatprep.subr.mxu0 0.0
        %237 = vmatpush1.msra.mxu0 0.0
        %238 = vmatprep.subr.mxu0 0.0
        %239 = vmatpush1.msra.mxu0 0.0
        %240 = vmatprep.subr.mxu0 0.0
        %241 = vmatpush1.msra.mxu0 0.0
        %242 = vmatprep.subr.mxu0 0.0
        %243 = vmatpush1.msra.mxu0 0.0
        %244 = vmatprep.subr.mxu0 0.0
        %245 = vmatpush1.msra.mxu0 0.0
        %246 = vmatprep.subr.mxu0 0.0
        %247 = vmatpush1.msra.mxu0 0.0
        %248 = vmatprep.subr.mxu0 0.0
        %249 = vmatpush1.msra.mxu0 0.0
        %250 = vmatprep.subr.mxu0 0.0
        %251 = vmatpush1.msra.mxu0 0.0
        %252 = vmatprep.subr.mxu0 0.0
        %253 = vmatpush1.msra.mxu0 0.0
        %254 = vmatprep.subr.mxu0 0.0
        %255 = vmatpush1.msra.mxu0 0.0
        %256 = vmatprep.subr.mxu0 0.0
        %257 = vmatpush1.msra.mxu0 0.0
        %258 = vmatprep.subr.mxu0 0.0
        %259 = vmatpush1.msra.mxu0 0.0
        %260 = vmatprep.subr.mxu0 0.0
        %261 = vmatpush1.msra.mxu0 0.0
        %262 = vmatprep.subr.mxu0 0.0
        %263 = vmatpush1.msra.mxu0 0.0
        %264 = vmatprep.subr.mxu0 0.0
        %265 = vmatpush1.msra.mxu0 0.0
        %266 = vmatprep.subr.mxu0 0.0
        %267 = vmatpush1.msra.mxu0 0.0
        %268 = vmatprep.subr.mxu0 0.0
        %269 = vmatpush1.msra.mxu0 0.0
        %270 = vmatprep.subr.mxu0 0.0
        %271 = vmatpush1.msra.mxu0 0.0
        %272 = vmatprep.subr.mxu0 0.0
        %273 = vmatpush1.msra.mxu0 0.0
        %274 = vmatprep.subr.mxu0 0.0
        %275 = vmatpush1.msra.mxu0 0.0
        %276 = vmatprep.subr.mxu0 0.0
        %277 = vmatpush1.msra.mxu0 0.0
        %278 = vmatprep.subr.mxu0 0.0
        %279 = vmatpush1.msra.mxu0 0.0
        %280 = vmatprep.subr.mxu0 0.0
        %281 = vmatpush1.msra.mxu0 0.0
        %282 = vmatprep.subr.mxu0 0.0
        %283 = vmatpush1.msra.mxu0 0.0
        %284 = vmatprep.subr.mxu0 0.0
        %285 = vmatpush1.msra.mxu0 0.0
        %286 = vmatprep.subr.mxu0 0.0
        %287 = vmatpush1.msra.mxu0 0.0
        %288 = vmatprep.subr.mxu0 0.0
        %289 = vmatpush1.msra.mxu0 0.0
        %290 = vmatprep.subr.mxu0 0.0
        %291 = vmatpush1.msra.mxu0 0.0
        %292 = vmatprep.subr.mxu0 0.0
        %293 = vmatpush1.msra.mxu0 0.0
        %294 = vmatprep.subr.mxu0 0.0
        %295 = vmatpush1.msra.mxu0 0.0
        %296 = vmatprep.subr.mxu0 0.0
        %297 = vmatpush1.msra.mxu0 0.0
        %298 = vmatprep.mubr.f32.mxu0 0.0
        %299 = vmatmul.mubr.f32.gmra.mrb[0].mxu0 %v217
        %v300 = vpop.f32.mrb[0].mxu0
        %v301 = vadd.f32 0.0, %v300
        %v302 = vpop.f32.mrb[0].mxu0
        %v303 = vadd.f32 0.0, %v302
        %304 = vmatprep.mubr.f32.mxu0 0.0
        %305 = vmatmul.mubr.f32.gmra.mrb[0].mxu0 %v220
        %v306 = vpop.f32.mrb[0].mxu0
        %v307 = vadd.f32 0.0, %v306
        %v308 = vpop.f32.mrb[0].mxu0
        %v309 = vadd.f32 0.0, %v308
        %310 = vmatprep.mubr.f32.mxu0 0.0
        %311 = vmatmul.mubr.f32.gmra.mrb[0].mxu0 %v223
        %v312 = vpop.f32.mrb[0].mxu0
        %v313 = vadd.f32 0.0, %v312
        %v314 = vpop.f32.mrb[0].mxu0
        %v315 = vadd.f32 0.0, %v314
        %316 = vdwg.mxu0
        %317 = vmatprep.subr.mxu0 %v232
        %318 = vmatpush1.msra.mxu0 %v230
        %319 = vmatprep.subr.mxu0 0.0
        %320 = vmatpush1.msra.mxu0 0.0
        %321 = vmatprep.subr.mxu0 0.0
        %322 = vmatpush1.msra.mxu0 0.0
        %323 = vmatprep.subr.mxu0 0.0
        %324 = vmatpush1.msra.mxu0 0.0
        %325 = vmatprep.subr.mxu0 0.0
        %326 = vmatpush1.msra.mxu0 0.0
        %327 = vmatprep.subr.mxu0 0.0
        %328 = vmatpush1.msra.mxu0 0.0
        %329 = vmatprep.subr.mxu0 0.0
        %330 = vmatpush1.msra.mxu0 0.0
        %331 = vmatprep.subr.mxu0 0.0
        %332 = vmatpush1.msra.mxu0 0.0
        %333 = vmatprep.subr.mxu0 0.0
        %334 = vmatpush1.msra.mxu0 0.0
        %335 = vmatprep.subr.mxu0 0.0
        %336 = vmatpush1.msra.mxu0 0.0
        %337 = vmatprep.subr.mxu0 0.0
        %338 = vmatpush1.msra.mxu0 0.0
        %339 = vmatprep.subr.mxu0 0.0
        %340 = vmatpush1.msra.mxu0 0.0
        %341 = vmatprep.subr.mxu0 0.0
        %342 = vmatpush1.msra.mxu0 0.0
        %343 = vmatprep.subr.mxu0 0.0
        %344 = vmatpush1.msra.mxu0 0.0
        %345 = vmatprep.subr.mxu0 0.0
        %346 = vmatpush1.msra.mxu0 0.0
        %347 = vmatprep.subr.mxu0 0.0
        %348 = vmatpush1.msra.mxu0 0.0
        %349 = vmatprep.subr.mxu0 0.0
        %350 = vmatpush1.msra.mxu0 0.0
        %351 = vmatprep.subr.mxu0 0.0
        %352 = vmatpush1.msra.mxu0 0.0
        %353 = vmatprep.subr.mxu0 0.0
        %354 = vmatpush1.msra.mxu0 0.0
        %355 = vmatprep.subr.mxu0 0.0
        %356 = vmatpush1.msra.mxu0 0.0
        %357 = vmatprep.subr.mxu0 0.0
        %358 = vmatpush1.msra.mxu0 0.0
        %359 = vmatprep.subr.mxu0 0.0
        %360 = vmatpush1.msra.mxu0 0.0
        %361 = vmatprep.subr.mxu0 0.0
        %362 = vmatpush1.msra.mxu0 0.0
        %363 = vmatprep.subr.mxu0 0.0
        %364 = vmatpush1.msra.mxu0 0.0
        %365 = vmatprep.subr.mxu0 0.0
        %366 = vmatpush1.msra.mxu0 0.0
        %367 = vmatprep.subr.mxu0 0.0
        %368 = vmatpush1.msra.mxu0 0.0
        %369 = vmatprep.subr.mxu0 0.0
        %370 = vmatpush1.msra.mxu0 0.0
        %371 = vmatprep.subr.mxu0 0.0
        %372 = vmatpush1.msra.mxu0 0.0
        %373 = vmatprep.subr.mxu0 0.0
        %374 = vmatpush1.msra.mxu0 0.0
        %375 = vmatprep.subr.mxu0 0.0
        %376 = vmatpush1.msra.mxu0 0.0
        %377 = vmatprep.subr.mxu0 0.0
        %378 = vmatpush1.msra.mxu0 0.0
        %379 = vmatprep.subr.mxu0 0.0
        %380 = vmatpush1.msra.mxu0 0.0
        %381 = vmatprep.mubr.f32.mxu0 0.0
        %382 = vmatmul.mubr.f32.gmra.mrb[0].mxu0 %v217
        %v383 = vpop.f32.mrb[0].mxu0
        %v384 = vadd.f32 0.0, %v383
        %v385 = vpop.f32.mrb[0].mxu0
        %v386 = vadd.f32 0.0, %v385
        %387 = vmatprep.mubr.f32.mxu0 0.0
        %388 = vmatmul.mubr.f32.gmra.mrb[0].mxu0 %v220
        %v389 = vpop.f32.mrb[0].mxu0
        %v390 = vadd.f32 0.0, %v389
        %v391 = vpop.f32.mrb[0].mxu0
        %v392 = vadd.f32 0.0, %v391
        %393 = vmatprep.mubr.f32.mxu0 0.0
        %394 = vmatmul.mubr.f32.gmra.mrb[0].mxu0 %v223
        %v395 = vpop.f32.mrb[0].mxu0
        %v396 = vadd.f32 0.0, %v395
        %v397 = vpop.f32.mrb[0].mxu0
        %v398 = vadd.f32 0.0, %v397
        %399 = vdwg.mxu0
        %v400 = vld [vmem:[%s2] sm:$0xff]
        %402 = vset.pattern.permute.xlu0 0
        %403 = vperm.xlu0 %402, %v400
        %v404 = vpop.permute.xlu0 %403
        %v406 = vadd.f32 %v307, %v404
        %v407 = vadd.f32 %v309, %v404
        %v408 = vadd.f32 %v390, %v404
        %412 = vrot.lane.b32.xlu0 %v406, 25
        %v413 = vpop.permute.xlu0 %412
        %414 = vrot.lane.b32.xlu0 %v407, 25
        %v415 = vpop.permute.xlu0 %414
        %416 = vrot.lane.b32.xlu0 %v408, 25
        %v417 = vpop.permute.xlu0 %416
        %vm418 = vcmask 203776
        %v419 = vsel %vm418, %v413, %v415
        %v420 = vsel %vm418, %v415, %v417
        %v425 = vmul.f32 %v301, %v413
        %v426 = vmul.f32 %v303, %v419
        %v427 = vmul.f32 %v384, %v420
        %v428 = vmul.f32 %v386, %v417
        %429 = vset.pattern.permute.xlu0 1
        %430 = vperm.xlu0 %429, %v400
        %v431 = vpop.permute.xlu0 %430
        %v433 = vadd.f32 %v307, %v431
        %v434 = vadd.f32 %v309, %v431
        %v435 = vadd.f32 %v390, %v431
        %v436 = vadd.f32 %v392, %v431
        %441 = vrot.lane.b32.xlu0 %v433, 24
        %v442 = vpop.permute.xlu0 %441
        %443 = vrot.lane.b32.xlu0 %v434, 24
        %v444 = vpop.permute.xlu0 %443
        %445 = vrot.lane.b32.xlu0 %v435, 24
        %v446 = vpop.permute.xlu0 %445
        %447 = vrot.lane.b32.xlu0 %v436, 24
        %v448 = vpop.permute.xlu0 %447
        %vm449 = vcmask 195584
        %v450 = vsel %vm449, %v442, %v444
        %v451 = vsel %vm449, %v444, %v446
        %v452 = vsel %vm449, %v446, %v448
        %v457 = vmul.f32 %v301, %v442
        %v458 = vmul.f32 %v303, %v450
        %v459 = vmul.f32 %v384, %v451
        %v460 = vmul.f32 %v386, %v452
        %v461 = vmax.f32 %v425, %v457
        %v462 = vmax.f32 %v426, %v458
        %v463 = vmax.f32 %v427, %v459
        %v464 = vmax.f32 %v428, %v460
        %465 = vset.pattern.permute.xlu0 2
        %466 = vperm.xlu0 %465, %v400
        %v467 = vpop.permute.xlu0 %466
        %v469 = vadd.f32 %v307, %v467
        %v470 = vadd.f32 %v309, %v467
        %v471 = vadd.f32 %v390, %v467
        %v472 = vadd.f32 %v392, %v467
        %477 = vrot.lane.b32.xlu0 %v469, 23
        %v478 = vpop.permute.xlu0 %477
        %479 = vrot.lane.b32.xlu0 %v470, 23
        %v480 = vpop.permute.xlu0 %479
        %481 = vrot.lane.b32.xlu0 %v471, 23
        %v482 = vpop.permute.xlu0 %481
        %483 = vrot.lane.b32.xlu0 %v472, 23
        %v484 = vpop.permute.xlu0 %483
        %vm485 = vcmask 187392
        %v486 = vsel %vm485, %v478, %v480
        %v487 = vsel %vm485, %v480, %v482
        %v488 = vsel %vm485, %v482, %v484
        %v493 = vmul.f32 %v301, %v478
        %v494 = vmul.f32 %v303, %v486
        %v495 = vmul.f32 %v384, %v487
        %v496 = vmul.f32 %v386, %v488
        %v497 = vmax.f32 %v461, %v493
        %v498 = vmax.f32 %v462, %v494
        %v499 = vmax.f32 %v463, %v495
        %v500 = vmax.f32 %v464, %v496
        %501 = vset.pattern.permute.xlu0 3
        %502 = vperm.xlu0 %501, %v400
        %v503 = vpop.permute.xlu0 %502
        %v505 = vadd.f32 %v307, %v503
        %v506 = vadd.f32 %v309, %v503
        %v507 = vadd.f32 %v390, %v503
        %v508 = vadd.f32 %v392, %v503
        %513 = vrot.lane.b32.xlu0 %v505, 1
        %v514 = vpop.permute.xlu0 %513
        %515 = vrot.lane.b32.xlu0 %v506, 1
        %v516 = vpop.permute.xlu0 %515
        %517 = vrot.lane.b32.xlu0 %v507, 1
        %v518 = vpop.permute.xlu0 %517
        %519 = vrot.lane.b32.xlu0 %v508, 1
        %v520 = vpop.permute.xlu0 %519
        %vm521 = vcmask 7168
        %v522 = vsel %vm521, %v514, %v516
        %v523 = vsel %vm521, %v516, %v518
        %v524 = vsel %vm521, %v518, %v520
        %v529 = vmul.f32 %v301, %v514
        %v530 = vmul.f32 %v303, %v522
        %v531 = vmul.f32 %v384, %v523
        %v532 = vmul.f32 %v386, %v524
        %v533 = vmax.f32 %v497, %v529
        %v534 = vmax.f32 %v498, %v530
        %v535 = vmax.f32 %v499, %v531
        %v536 = vmax.f32 %v500, %v532
        %537 = vset.pattern.permute.xlu0 4
        %538 = vperm.xlu0 %537, %v400
        %v539 = vpop.permute.xlu0 %538
        %v541 = vadd.f32 %v307, %v539
        %v542 = vadd.f32 %v309, %v539
        %v543 = vadd.f32 %v390, %v539
        %v544 = vadd.f32 %v392, %v539
        %v545 = vmul.f32 %v301, %v541
        %v546 = vmul.f32 %v303, %v542
        %v547 = vmul.f32 %v384, %v543
        %v548 = vmul.f32 %v386, %v544
        %v549 = vmax.f32 %v533, %v545
        %v550 = vmax.f32 %v534, %v546
        %v551 = vmax.f32 %v535, %v547
        %v552 = vmax.f32 %v536, %v548
        %553 = vset.pattern.permute.xlu0 5
        %554 = vperm.xlu0 %553, %v400
        %v555 = vpop.permute.xlu0 %554
        %v557 = vadd.f32 %v307, %v555
        %v558 = vadd.f32 %v309, %v555
        %v559 = vadd.f32 %v390, %v555
        %v560 = vadd.f32 %v392, %v555
        %565 = vrot.lane.b32.xlu0 %v557, 127
        %v566 = vpop.permute.xlu0 %565
        %567 = vrot.lane.b32.xlu0 %v558, 127
        %v568 = vpop.permute.xlu0 %567
        %569 = vrot.lane.b32.xlu0 %v559, 127
        %v570 = vpop.permute.xlu0 %569
        %571 = vrot.lane.b32.xlu0 %v560, 127
        %v572 = vpop.permute.xlu0 %571
        %vm573 = vcmask 1039360
        %v574 = vsel %vm573, %v566, %v568
        %v575 = vsel %vm573, %v568, %v570
        %v576 = vsel %vm573, %v570, %v572
        %v581 = vmul.f32 %v301, %v574
        %v582 = vmul.f32 %v303, %v575
        %v583 = vmul.f32 %v384, %v576
        %v584 = vmul.f32 %v386, %v572
        %v585 = vmax.f32 %v549, %v581
        %v586 = vmax.f32 %v550, %v582
        %v587 = vmax.f32 %v551, %v583
        %v588 = vmax.f32 %v552, %v584
        %589 = vset.pattern.permute.xlu0 6
        %590 = vperm.xlu0 %589, %v400
        %v591 = vpop.permute.xlu0 %590
        %v593 = vadd.f32 %v307, %v591
        %v594 = vadd.f32 %v309, %v591
        %v595 = vadd.f32 %v390, %v591
        %v596 = vadd.f32 %v392, %v591
        %601 = vrot.lane.b32.xlu0 %v593, 105
        %v602 = vpop.permute.xlu0 %601
        %603 = vrot.lane.b32.xlu0 %v594, 105
        %v604 = vpop.permute.xlu0 %603
        %605 = vrot.lane.b32.xlu0 %v595, 105
        %v606 = vpop.permute.xlu0 %605
        %607 = vrot.lane.b32.xlu0 %v596, 105
        %v608 = vpop.permute.xlu0 %607
        %vm609 = vcmask 859136
        %v610 = vsel %vm609, %v602, %v604
        %v611 = vsel %vm609, %v604, %v606
        %v612 = vsel %vm609, %v606, %v608
        %v617 = vmul.f32 %v301, %v610
        %v618 = vmul.f32 %v303, %v611
        %v619 = vmul.f32 %v384, %v612
        %v620 = vmul.f32 %v386, %v608
        %v621 = vmax.f32 %v585, %v617
        %v622 = vmax.f32 %v586, %v618
        %v623 = vmax.f32 %v587, %v619
        %v624 = vmax.f32 %v588, %v620
        %625 = vset.pattern.permute.xlu0 7
        %626 = vperm.xlu0 %625, %v400
        %v627 = vpop.permute.xlu0 %626
        %v629 = vadd.f32 %v307, %v627
        %v630 = vadd.f32 %v309, %v627
        %v631 = vadd.f32 %v390, %v627
        %v632 = vadd.f32 %v392, %v627
        %637 = vrot.lane.b32.xlu0 %v629, 104
        %v638 = vpop.permute.xlu0 %637
        %639 = vrot.lane.b32.xlu0 %v630, 104
        %v640 = vpop.permute.xlu0 %639
        %641 = vrot.lane.b32.xlu0 %v631, 104
        %v642 = vpop.permute.xlu0 %641
        %643 = vrot.lane.b32.xlu0 %v632, 104
        %v644 = vpop.permute.xlu0 %643
        %vm645 = vcmask 850944
        %v646 = vsel %vm645, %v638, %v640
        %v647 = vsel %vm645, %v640, %v642
        %v648 = vsel %vm645, %v642, %v644
        %v653 = vmul.f32 %v301, %v646
        %v654 = vmul.f32 %v303, %v647
        %v655 = vmul.f32 %v384, %v648
        %v656 = vmul.f32 %v386, %v644
        %v657 = vmax.f32 %v621, %v653
        %v658 = vmax.f32 %v622, %v654
        %v659 = vmax.f32 %v623, %v655
        %v660 = vmax.f32 %v624, %v656
        %661 = vset.pattern.permute.xlu0 8
        %662 = vperm.xlu0 %661, %v400
        %v663 = vpop.permute.xlu0 %662
        %v665 = vadd.f32 %v307, %v663
        %v666 = vadd.f32 %v309, %v663
        %v667 = vadd.f32 %v390, %v663
        %v668 = vadd.f32 %v392, %v663
        %673 = vrot.lane.b32.xlu0 %v665, 103
        %v674 = vpop.permute.xlu0 %673
        %675 = vrot.lane.b32.xlu0 %v666, 103
        %v676 = vpop.permute.xlu0 %675
        %677 = vrot.lane.b32.xlu0 %v667, 103
        %v678 = vpop.permute.xlu0 %677
        %679 = vrot.lane.b32.xlu0 %v668, 103
        %v680 = vpop.permute.xlu0 %679
        %vm681 = vcmask 842752
        %v682 = vsel %vm681, %v674, %v676
        %v683 = vsel %vm681, %v676, %v678
        %v684 = vsel %vm681, %v678, %v680
        %v689 = vmul.f32 %v301, %v682
        %v690 = vmul.f32 %v303, %v683
        %v691 = vmul.f32 %v384, %v684
        %v692 = vmul.f32 %v386, %v680
        %v693 = vmax.f32 %v657, %v689
        %v694 = vmax.f32 %v658, %v690
        %v695 = vmax.f32 %v659, %v691
        %v696 = vmax.f32 %v660, %v692
        %v697 = vsub.f32 %v425, %v693
        %v698 = vsub.f32 %v426, %v694
        %v699 = vsub.f32 %v427, %v695
        %v700 = vsub.f32 %v428, %v696
        %v701 = vmul.f32 %v697, 1.442695
        %v702 = vpow.pop %v701
        %v703 = vmul.f32 %v698, 1.442695
        %v704 = vpow.pop %v703
        %v705 = vmul.f32 %v699, 1.442695
        %v706 = vpow.pop %v705
        %v707 = vmul.f32 %v700, 1.442695
        %v708 = vpow.pop %v707
        %712 = vrot.lane.b32.xlu0 %v313, 25
        %v713 = vpop.permute.xlu0 %712
        %714 = vrot.lane.b32.xlu0 %v315, 25
        %v715 = vpop.permute.xlu0 %714
        %716 = vrot.lane.b32.xlu0 %v396, 25
        %v717 = vpop.permute.xlu0 %716
        %v718 = vsel %vm418, %v713, %v715
        %v719 = vsel %vm418, %v715, %v717
        %v724 = vmul.f32 %v702, %v713
        %v725 = vmul.f32 %v704, %v718
        %v726 = vmul.f32 %v706, %v719
        %v727 = vmul.f32 %v708, %v717
        %v728 = vsub.f32 %v457, %v693
        %v729 = vsub.f32 %v458, %v694
        %v730 = vsub.f32 %v459, %v695
        %v731 = vsub.f32 %v460, %v696
        %v732 = vmul.f32 %v728, 1.442695
        %v733 = vpow.pop %v732
        %v734 = vmul.f32 %v729, 1.442695
        %v735 = vpow.pop %v734
        %v736 = vmul.f32 %v730, 1.442695
        %v737 = vpow.pop %v736
        %v738 = vmul.f32 %v731, 1.442695
        %v739 = vpow.pop %v738
        %v740 = vadd.f32 %v702, %v733
        %v741 = vadd.f32 %v704, %v735
        %v742 = vadd.f32 %v706, %v737
        %v743 = vadd.f32 %v708, %v739
        %745 = vrot.lane.b32.xlu0 %v313, 24
        %v746 = vpop.permute.xlu0 %745
        %747 = vrot.lane.b32.xlu0 %v315, 24
        %v748 = vpop.permute.xlu0 %747
        %749 = vrot.lane.b32.xlu0 %v396, 24
        %v750 = vpop.permute.xlu0 %749
        %751 = vrot.lane.b32.xlu0 %v398, 24
        %v752 = vpop.permute.xlu0 %751
        %v753 = vsel %vm449, %v746, %v748
        %v754 = vsel %vm449, %v748, %v750
        %v755 = vsel %vm449, %v750, %v752
        %v760 = vmul.f32 %v733, %v746
        %v761 = vmul.f32 %v735, %v753
        %v762 = vmul.f32 %v737, %v754
        %v763 = vmul.f32 %v739, %v755
        %v764 = vadd.f32 %v724, %v760
        %v765 = vadd.f32 %v725, %v761
        %v766 = vadd.f32 %v726, %v762
        %v767 = vadd.f32 %v727, %v763
        %v768 = vsub.f32 %v493, %v693
        %v769 = vsub.f32 %v494, %v694
        %v770 = vsub.f32 %v495, %v695
        %v771 = vsub.f32 %v496, %v696
        %v772 = vmul.f32 %v768, 1.442695
        %v773 = vpow.pop %v772
        %v774 = vmul.f32 %v769, 1.442695
        %v775 = vpow.pop %v774
        %v776 = vmul.f32 %v770, 1.442695
        %v777 = vpow.pop %v776
        %v778 = vmul.f32 %v771, 1.442695
        %v779 = vpow.pop %v778
        %v780 = vadd.f32 %v740, %v773
        %v781 = vadd.f32 %v741, %v775
        %v782 = vadd.f32 %v742, %v777
        %v783 = vadd.f32 %v743, %v779
        %784 = vrot.lane.b32.xlu0 %v313, 23
        %v785 = vpop.permute.xlu0 %784
        %786 = vrot.lane.b32.xlu0 %v315, 23
        %v787 = vpop.permute.xlu0 %786
        %788 = vrot.lane.b32.xlu0 %v396, 23
        %v789 = vpop.permute.xlu0 %788
        %790 = vrot.lane.b32.xlu0 %v398, 23
        %v791 = vpop.permute.xlu0 %790
        %v792 = vsel %vm485, %v785, %v787
        %v793 = vsel %vm485, %v787, %v789
        %v794 = vsel %vm485, %v789, %v791
        %v799 = vmul.f32 %v773, %v785
        %v800 = vmul.f32 %v775, %v792
        %v801 = vmul.f32 %v777, %v793
        %v802 = vmul.f32 %v779, %v794
        %v803 = vadd.f32 %v764, %v799
        %v804 = vadd.f32 %v765, %v800
        %v805 = vadd.f32 %v766, %v801
        %v806 = vadd.f32 %v767, %v802
        %v807 = vsub.f32 %v529, %v693
        %v808 = vsub.f32 %v530, %v694
        %v809 = vsub.f32 %v531, %v695
        %v810 = vsub.f32 %v532, %v696
        %v811 = vmul.f32 %v807, 1.442695
        %v812 = vpow.pop %v811
        %v813 = vmul.f32 %v808, 1.442695
        %v814 = vpow.pop %v813
        %v815 = vmul.f32 %v809, 1.442695
        %v816 = vpow.pop %v815
        %v817 = vmul.f32 %v810, 1.442695
        %v818 = vpow.pop %v817
        %v819 = vadd.f32 %v780, %v812
        %v820 = vadd.f32 %v781, %v814
        %v821 = vadd.f32 %v782, %v816
        %v822 = vadd.f32 %v783, %v818
        %823 = vrot.lane.b32.xlu0 %v313, 1
        %v824 = vpop.permute.xlu0 %823
        %825 = vrot.lane.b32.xlu0 %v315, 1
        %v826 = vpop.permute.xlu0 %825
        %827 = vrot.lane.b32.xlu0 %v396, 1
        %v828 = vpop.permute.xlu0 %827
        %829 = vrot.lane.b32.xlu0 %v398, 1
        %v830 = vpop.permute.xlu0 %829
        %v831 = vsel %vm521, %v824, %v826
        %v832 = vsel %vm521, %v826, %v828
        %v833 = vsel %vm521, %v828, %v830
        %v838 = vmul.f32 %v812, %v824
        %v839 = vmul.f32 %v814, %v831
        %v840 = vmul.f32 %v816, %v832
        %v841 = vmul.f32 %v818, %v833
        %v842 = vadd.f32 %v803, %v838
        %v843 = vadd.f32 %v804, %v839
        %v844 = vadd.f32 %v805, %v840
        %v845 = vadd.f32 %v806, %v841
        %v846 = vsub.f32 %v545, %v693
        %v847 = vsub.f32 %v546, %v694
        %v848 = vsub.f32 %v547, %v695
        %v849 = vsub.f32 %v548, %v696
        %v850 = vmul.f32 %v846, 1.442695
        %v851 = vpow.pop %v850
        %v852 = vmul.f32 %v847, 1.442695
        %v853 = vpow.pop %v852
        %v854 = vmul.f32 %v848, 1.442695
        %v855 = vpow.pop %v854
        %v856 = vmul.f32 %v849, 1.442695
        %v857 = vpow.pop %v856
        %v858 = vadd.f32 %v819, %v851
        %v859 = vadd.f32 %v820, %v853
        %v860 = vadd.f32 %v821, %v855
        %v861 = vadd.f32 %v822, %v857
        %v862 = vmul.f32 %v851, %v313
        %v863 = vmul.f32 %v853, %v315
        %v864 = vmul.f32 %v855, %v396
        %v865 = vmul.f32 %v857, %v398
        %v866 = vadd.f32 %v842, %v862
        %v867 = vadd.f32 %v843, %v863
        %v868 = vadd.f32 %v844, %v864
        %v869 = vadd.f32 %v845, %v865
        %v870 = vsub.f32 %v581, %v693
        %v871 = vsub.f32 %v582, %v694
        %v872 = vsub.f32 %v583, %v695
        %v873 = vsub.f32 %v584, %v696
        %v874 = vmul.f32 %v870, 1.442695
        %v875 = vpow.pop %v874
        %v876 = vmul.f32 %v871, 1.442695
        %v877 = vpow.pop %v876
        %v878 = vmul.f32 %v872, 1.442695
        %v879 = vpow.pop %v878
        %v880 = vmul.f32 %v873, 1.442695
        %v881 = vpow.pop %v880
        %v882 = vadd.f32 %v858, %v875
        %v883 = vadd.f32 %v859, %v877
        %v884 = vadd.f32 %v860, %v879
        %v885 = vadd.f32 %v861, %v881
        %886 = vrot.lane.b32.xlu0 %v313, 127
        %v887 = vpop.permute.xlu0 %886
        %888 = vrot.lane.b32.xlu0 %v315, 127
        %v889 = vpop.permute.xlu0 %888
        %890 = vrot.lane.b32.xlu0 %v396, 127
        %v891 = vpop.permute.xlu0 %890
        %892 = vrot.lane.b32.xlu0 %v398, 127
        %v893 = vpop.permute.xlu0 %892
        %v894 = vsel %vm573, %v887, %v889
        %v895 = vsel %vm573, %v889, %v891
        %v896 = vsel %vm573, %v891, %v893
        %v901 = vmul.f32 %v875, %v894
        %v902 = vmul.f32 %v877, %v895
        %v903 = vmul.f32 %v879, %v896
        %v904 = vmul.f32 %v881, %v893
        %v905 = vadd.f32 %v866, %v901
        %v906 = vadd.f32 %v867, %v902
        %v907 = vadd.f32 %v868, %v903
        %v908 = vadd.f32 %v869, %v904
        %v909 = vsub.f32 %v617, %v693
        %v910 = vsub.f32 %v618, %v694
        %v911 = vsub.f32 %v619, %v695
        %v912 = vsub.f32 %v620, %v696
        %v913 = vmul.f32 %v909, 1.442695
        %v914 = vpow.pop %v913
        %v915 = vmul.f32 %v910, 1.442695
        %v916 = vpow.pop %v915
        %v917 = vmul.f32 %v911, 1.442695
        %v918 = vpow.pop %v917
        %v919 = vmul.f32 %v912, 1.442695
        %v920 = vpow.pop %v919
        %v921 = vadd.f32 %v882, %v914
        %v922 = vadd.f32 %v883, %v916
        %v923 = vadd.f32 %v884, %v918
        %v924 = vadd.f32 %v885, %v920
        %925 = vrot.lane.b32.xlu0 %v313, 105
        %v926 = vpop.permute.xlu0 %925
        %927 = vrot.lane.b32.xlu0 %v315, 105
        %v928 = vpop.permute.xlu0 %927
        %929 = vrot.lane.b32.xlu0 %v396, 105
        %v930 = vpop.permute.xlu0 %929
        %931 = vrot.lane.b32.xlu0 %v398, 105
        %v932 = vpop.permute.xlu0 %931
        %v933 = vsel %vm609, %v926, %v928
        %v934 = vsel %vm609, %v928, %v930
        %v935 = vsel %vm609, %v930, %v932
        %v940 = vmul.f32 %v914, %v933
        %v941 = vmul.f32 %v916, %v934
        %v942 = vmul.f32 %v918, %v935
        %v943 = vmul.f32 %v920, %v932
        %v944 = vadd.f32 %v905, %v940
        %v945 = vadd.f32 %v906, %v941
        %v946 = vadd.f32 %v907, %v942
        %v947 = vadd.f32 %v908, %v943
        %v948 = vsub.f32 %v653, %v693
        %v949 = vsub.f32 %v654, %v694
        %v950 = vsub.f32 %v655, %v695
        %v951 = vsub.f32 %v656, %v696
        %v952 = vmul.f32 %v948, 1.442695
        %v953 = vpow.pop %v952
        %v954 = vmul.f32 %v949, 1.442695
        %v955 = vpow.pop %v954
        %v956 = vmul.f32 %v950, 1.442695
        %v957 = vpow.pop %v956
        %v958 = vmul.f32 %v951, 1.442695
        %v959 = vpow.pop %v958
        %v960 = vadd.f32 %v921, %v953
        %v961 = vadd.f32 %v922, %v955
        %v962 = vadd.f32 %v923, %v957
        %v963 = vadd.f32 %v924, %v959
        %964 = vrot.lane.b32.xlu0 %v313, 104
        %v965 = vpop.permute.xlu0 %964
        %966 = vrot.lane.b32.xlu0 %v315, 104
        %v967 = vpop.permute.xlu0 %966
        %968 = vrot.lane.b32.xlu0 %v396, 104
        %v969 = vpop.permute.xlu0 %968
        %970 = vrot.lane.b32.xlu0 %v398, 104
        %v971 = vpop.permute.xlu0 %970
        %v972 = vsel %vm645, %v965, %v967
        %v973 = vsel %vm645, %v967, %v969
        %v974 = vsel %vm645, %v969, %v971
        %v979 = vmul.f32 %v953, %v972
        %v980 = vmul.f32 %v955, %v973
        %v981 = vmul.f32 %v957, %v974
        %v982 = vmul.f32 %v959, %v971
        %v983 = vadd.f32 %v944, %v979
        %v984 = vadd.f32 %v945, %v980
        %v985 = vadd.f32 %v946, %v981
        %v986 = vadd.f32 %v947, %v982
        %v987 = vsub.f32 %v689, %v693
        %v988 = vsub.f32 %v690, %v694
        %v989 = vsub.f32 %v691, %v695
        %v990 = vsub.f32 %v692, %v696
        %v991 = vmul.f32 %v987, 1.442695
        %v992 = vpow.pop %v991
        %v993 = vmul.f32 %v988, 1.442695
        %v994 = vpow.pop %v993
        %v995 = vmul.f32 %v989, 1.442695
        %v996 = vpow.pop %v995
        %v997 = vmul.f32 %v990, 1.442695
        %v998 = vpow.pop %v997
        %v999 = vadd.f32 %v960, %v992
        %v1000 = vadd.f32 %v961, %v994
        %v1001 = vadd.f32 %v962, %v996
        %v1002 = vadd.f32 %v963, %v998
        %1003 = vrot.lane.b32.xlu0 %v313, 103
        %v1004 = vpop.permute.xlu0 %1003
        %1005 = vrot.lane.b32.xlu0 %v315, 103
        %v1006 = vpop.permute.xlu0 %1005
        %1007 = vrot.lane.b32.xlu0 %v396, 103
        %v1008 = vpop.permute.xlu0 %1007
        %1009 = vrot.lane.b32.xlu0 %v398, 103
        %v1010 = vpop.permute.xlu0 %1009
        %v1011 = vsel %vm681, %v1004, %v1006
        %v1012 = vsel %vm681, %v1006, %v1008
        %v1013 = vsel %vm681, %v1008, %v1010
        %v1018 = vmul.f32 %v992, %v1011
        %v1019 = vmul.f32 %v994, %v1012
        %v1020 = vmul.f32 %v996, %v1013
        %v1021 = vmul.f32 %v998, %v1010
        %v1022 = vadd.f32 %v983, %v1018
        %v1023 = vadd.f32 %v984, %v1019
        %v1024 = vadd.f32 %v985, %v1020
        %v1025 = vadd.f32 %v986, %v1021
        %v1026 = vrcp.pop %v999
        %v1027 = vrcp.pop %v1000
        %v1028 = vrcp.pop %v1001
        %v1029 = vrcp.pop %v1002
        %v1030 = vmul.f32 %v999, %v1026
        %v1031 = vmul.f32 %v1000, %v1027
        %v1032 = vmul.f32 %v1001, %v1028
        %v1033 = vmul.f32 %v1002, %v1029
        %v1034 = vsub.f32 2.0, %v1030
        %v1035 = vsub.f32 2.0, %v1031
        %v1036 = vsub.f32 2.0, %v1032
        %v1037 = vsub.f32 2.0, %v1033
        %v1038 = vmul.f32 %v1026, %v1034
        %v1039 = vmul.f32 %v1027, %v1035
        %v1040 = vmul.f32 %v1028, %v1036
        %v1041 = vmul.f32 %v1029, %v1037
        %v1042 = vmul.f32 %v1022, %v1038
        %v1043 = vmul.f32 %v1023, %v1039
        %v1044 = vmul.f32 %v1024, %v1040
        %v1045 = vmul.f32 %v1025, %v1041
        %1050 = vrot.lane.b32.xlu0 %v1042, 103
        %v1051 = vpop.permute.xlu0 %1050
        %1052 = vrot.lane.b32.xlu0 %v1043, 103
        %v1053 = vpop.permute.xlu0 %1052
        %1054 = vrot.lane.b32.xlu0 %v1044, 103
        %v1055 = vpop.permute.xlu0 %1054
        %1056 = vrot.lane.b32.xlu0 %v1045, 103
        %v1057 = vpop.permute.xlu0 %1056
        %v1058 = vsel %vm681, %v1051, %v1053
        %v1059 = vsel %vm681, %v1053, %v1055
        %v1060 = vsel %vm681, %v1055, %v1057
        %1064 = vst [vmem:[%s204] sm:$0xff] %v1058
        %1065 = vst [vmem:[%s204 + $0x8] sm:$0xff] %v1059
        %1066 = vst [vmem:[%s204 + $0x10] sm:$0xff] %v1060
        %s1067 = sand.u32 %s112, 1
        %s1068 = scalar_lea.sflag [#allocation4], %s1067
        %s1069 = sand.u32 %s112, 1
        %s1070 = smul.addr %s1069, 24
        %s1071 = scalar_lea.vmem [#allocation5], %s1070
        // Predicated region
        $region37: #{tpu_custom_call.1} parent=31 // pred_check
          %p1072 = pneg %p122
        $region38: #{tpu_custom_call.1} parent=31 // pred_check_branch
          %1074 = sbr.rel (%p1072) target = $region40
        $region39: #{tpu_custom_call.1} parent=31 // pred_region
          %s1075 = smul.u32 3, %s25
          %s1077 = ssub.s32 384, 384
          %1078 = vsyncadd %s1068, %s1077
          %s1079 = smul.addr %s24, 3
          %s1080 = sadd.s32 %s1075, %s1079
          %s1081 = smul.addr %s1080, 128
          %s1082 = scalar_lea.hbm %s3, %s1081
          %s1084 = sshll.u32 %s1071, 4
          %s1085 = int_to_ptr.vmem [resolvable:$true] %s1084
          %1087 = dma.vmem_to_hbm [thread:$0]  %s1085, 384, %s1082, %s1068
        $region40: #{tpu_custom_call.1} parent=31 // pred_fallthru
          _
      $region32: #{tpu_custom_call.1} parent=5 // pred_fallthru
        _
      %p1088 = scmp.le.s32.totalorder 2, %s15
      // Predicated region
      $region41: #{tpu_custom_call.1} parent=5 // pred_check
        %p1089 = pneg %p1088
      $region42: #{tpu_custom_call.1} parent=5 // pred_check_branch
        %1091 = sbr.rel (%p1089) target = $region44
      $region43: #{tpu_custom_call.1} parent=5 // pred_region
        %s1092 = ssub.s32 %s15, 2
        // Predicated region
        $region45: #{tpu_custom_call.1} parent=43 // pred_check
          %p1093 = pneg %p128
        $region46: #{tpu_custom_call.1} parent=43 // pred_check_branch
          %1095 = sbr.rel (%p1093) target = $region48
        $region47: #{tpu_custom_call.1} parent=43 // pred_region
          %s1096 = sand.u32 %s113, 1
          %s1097 = scalar_lea.sflag [#allocation4], %s1096
          %s1098 = sand.u32 %s113, 1
          %s1099 = smul.addr %s1098, 24
          %s1100 = scalar_lea.vmem [#allocation5], %s1099
          %1101 = dma.done %s1097, 384
        $region48: #{tpu_custom_call.1} parent=43 // pred_fallthru
          _
      $region44: #{tpu_custom_call.1} parent=5 // pred_fallthru
        _
    $region6: #{tpu_custom_call.1} parent=1 // loop_footer
      %s19 = sadd.s32 1, %s15
    $region7: #{tpu_custom_call.1} parent=1 // loop_footer_branch
      %14 = sbr.rel target = $region3
    $region8: #{tpu_custom_call.1} parent=1 // loop_exit
      _
    %1102 = vsyncpa [#allocation3], 1
    %s1103 = scalar_lea.sflag [#allocation3], 1
    %1104 = vsyncpa %s1103, 1
    %1105 = vsyncpa [#allocation4], 1
    %s1106 = scalar_lea.sflag [#allocation4], 1
    %1107 = vsyncpa %s1106, 1

</llo_original>
